<compile_context>
chip_gen: v7x
topology: tpu7x:2x2x1
jax: 0.10.0
libtpu: 0.0.40
codegen_flags: <defaults>
</compile_context>

<pallas_src>
import functools

import jax
import jax.numpy as jnp
from jax.experimental import pallas as pl
from jax.experimental.pallas import tpu as pltpu


def _round_up(x: int, m: int) -> int:
    return (x + m - 1) // m * m


# ------------------------------ fused kernel -------------------------------

def _make_decoder_kernel(n_layers, batch, hid_dim, d_pad, gate_pad):
    """Builds the fused multi-step decoder kernel for the given static config."""
    L, B, H, Dp, Gp = n_layers, batch, hid_dim, d_pad, gate_pad

    def kernel(tok_ref, emb_ref, h_in_ref, c_in_ref, w_ref, b_ref,
               fc_w_ref, fc_b_ref, pred_ref, h_out_ref, c_out_ref):
        # tok_ref:   (T, B)  int32 in SMEM (scalar prefetch)
        # emb_ref:   (Vp, Dp)       f32   embedding table (VMEM resident)
        # h_in/c_in: (L, Bp, Dp)    f32   initial state
        # w_ref:     (L, 2*Dp, Gp)  bf16  [W_ih ; W_hh], densely packed gates
        # b_ref:     (L, 1, Gp)     f32   b_ih + b_hh
        # fc_w_ref:  (Dp, Vp) bf16, fc_b_ref: (1, Vp) f32
        # pred_ref:  (1, Bp, Vp) block indexed by step t
        # h_out/c_out: (L, Bp, Dp)  f32   carried on-chip recurrent state
        t = pl.program_id(0)
        Bp = h_in_ref.shape[1]

        # Step 0: pull the encoder state into the VMEM-resident output blocks;
        # they act as the on-chip recurrent state for all T steps.
        @pl.when(t == 0)
        def _():
            h_out_ref[...] = h_in_ref[...]
            c_out_ref[...] = c_in_ref[...]

        # ---- embedding: direct row gather (token ids live in SMEM) ----------
        rows = [emb_ref[pl.ds(tok_ref[t, b], 1), :] for b in range(B)]
        if Bp > B:
            rows.append(jnp.zeros((Bp - B, Dp), emb_ref.dtype))
        x = jnp.concatenate(rows, axis=0)                       # (Bp, Dp) f32
        # TODO(synk): dropout p > 0 (training mode) not implemented; p=0 -> id.

        lane_g = jax.lax.broadcasted_iota(jnp.int32, (Bp, Gp), 1)
        is_tanh = (lane_g >= 2 * H) & (lane_g < 3 * H)          # 'g' gate strip
        valid = jax.lax.broadcasted_iota(jnp.int32, (Bp, Dp), 1) < H

        def fit(v):  # (Bp, Gp) -> (Bp, Dp); only lanes [0, H) are consumed.
            if Gp == Dp:
                return v
            if Gp > Dp:
                return v[:, :Dp]
            return jnp.concatenate(
                [v, jnp.zeros((v.shape[0], Dp - Gp), v.dtype)], axis=1)

        # Statically unrolled layer loop (L=2): state never leaves VMEM, one
        # fused MXU push per layer ([x ; h] @ [W_ih ; W_hh], dense gate pack).
        for l in range(L):
            h_prev = h_out_ref[l]                               # (Bp, Dp)
            c_prev = c_out_ref[l]
            xh = jnp.concatenate([x, h_prev], axis=1)           # (Bp, 2*Dp)
            gates = jnp.dot(xh.astype(w_ref.dtype), w_ref[l],
                            preferred_element_type=jnp.float32) + b_ref[l]
            act = jnp.where(is_tanh, jnp.tanh(gates), jax.nn.sigmoid(gates))
            # Align each H-wide gate strip to lanes [0, H) with XLU rotations.
            i_g = fit(act)
            f_g = fit(pltpu.roll(act, shift=Gp - 1 * H, axis=1))
            g_g = fit(pltpu.roll(act, shift=Gp - 2 * H, axis=1))
            o_g = fit(pltpu.roll(act, shift=Gp - 3 * H, axis=1))
            # Mask padded feature lanes back to exact zero every step.
            c_new = jnp.where(valid, f_g * c_prev + i_g * g_g, 0.0)
            h_new = jnp.where(valid, o_g * jnp.tanh(c_new), 0.0)
            h_out_ref[l] = h_new
            c_out_ref[l] = c_new
            x = h_new

        # fc_out projection for this step.  (Vp=128 here; tile over Vp with a
        # second grid axis only if the vocab grows to tens of thousands.)
        pred = jnp.dot(x.astype(fc_w_ref.dtype), fc_w_ref[...],
                       preferred_element_type=jnp.float32) + fc_b_ref[...]
        pred_ref[0] = pred

    return kernel


# ------------------------------ parameters ---------------------------------

def init_decoder_params(key, output_dim, emb_dim, hid_dim, n_layers):
    """PyTorch-like init; returns (packed kernel params, raw reference params)."""
    Dp = max(_round_up(emb_dim, 128), _round_up(hid_dim, 128))
    Gp = _round_up(4 * hid_dim, 128)
    Vp = _round_up(output_dim, 128)
    scale = 1.0 / float(hid_dim) ** 0.5

    keys = iter(jax.random.split(key, 4 * n_layers + 4))

    def uni(shape):
        return jax.random.uniform(next(keys), shape, jnp.float32, -scale, scale)

    # nn.Embedding default init: N(0, 1)
    emb = jax.random.normal(next(keys), (output_dim, emb_dim), jnp.float32)
    emb_p = jnp.zeros((Vp, Dp), jnp.float32).at[:output_dim, :emb_dim].set(emb)

    raw_lstm, w_layers, b_layers = [], [], []
    for l in range(n_layers):
        d_in = emb_dim if l == 0 else hid_dim
        w_ih = uni((d_in, 4 * hid_dim))       # transposed vs PyTorch (4H, d_in)
        w_hh = uni((hid_dim, 4 * hid_dim))    # transposed vs PyTorch (4H, H)
        b = uni((4 * hid_dim,)) + uni((4 * hid_dim,))   # b_ih + b_hh
        raw_lstm.append((w_ih, w_hh, b))

        # Dense fused layout: rows [0:Dp) <- input block, rows [Dp:2Dp) <-
        # hidden block; gate g occupies lanes [g*H, (g+1)*H) (4*H lane-aligned).
        w_p = jnp.zeros((2 * Dp, Gp), jnp.float32)
        w_p = w_p.at[:d_in, :4 * hid_dim].set(w_ih)
        w_p = w_p.at[Dp:Dp + hid_dim, :4 * hid_dim].set(w_hh)
        b_p = jnp.zeros((1, Gp), jnp.float32).at[0, :4 * hid_dim].set(b)
        w_layers.append(w_p)
        b_layers.append(b_p)

    fc_w = uni((hid_dim, output_dim))         # transposed vs PyTorch (V, H)
    fc_b = uni((output_dim,))
    fc_w_p = jnp.zeros((Dp, Vp), jnp.float32).at[:hid_dim, :output_dim].set(fc_w)
    fc_b_p = jnp.zeros((1, Vp), jnp.float32).at[0, :output_dim].set(fc_b)

    params = dict(
        emb=emb_p,                                       # f32 (row-gathered)
        w=jnp.stack(w_layers).astype(jnp.bfloat16),      # bf16 weight stream
        b=jnp.stack(b_layers),                           # f32 bias
        fc_w=fc_w_p.astype(jnp.bfloat16),
        fc_b=fc_b_p)
    raw = dict(emb=emb, lstm=raw_lstm, fc_w=fc_w, fc_b=fc_b)
    return params, raw


# ------------------------------- wrappers ------------------------------------

def _decode_impl(params, tokens, hidden, cell, *, output_dim):
    """Fused teacher-forced decode: tokens (T, B) int, hidden/cell (L, B, H)."""
    T, B = tokens.shape
    L, _, H = hidden.shape
    Dp = params["emb"].shape[1]
    Gp = params["w"].shape[-1]
    Vp = params["fc_w"].shape[1]
    Bp = max(8, _round_up(B, 8))

    h_p = jnp.zeros((L, Bp, Dp), jnp.float32).at[:, :B, :H].set(hidden)
    c_p = jnp.zeros((L, Bp, Dp), jnp.float32).at[:, :B, :H].set(cell)
    tok = tokens.astype(jnp.int32)

    kernel = _make_decoder_kernel(L, B, H, Dp, Gp)

    def const(ndim):
        return lambda t, tok_ref: (0,) * ndim

    grid_spec = pltpu.PrefetchScalarGridSpec(
        num_scalar_prefetch=1,
        grid=(T,),
        in_specs=[
            pl.BlockSpec(params["emb"].shape, const(2)),      # emb   (resident)
            pl.BlockSpec((L, Bp, Dp), const(3)),              # h_in  (resident)
            pl.BlockSpec((L, Bp, Dp), const(3)),              # c_in  (resident)
            pl.BlockSpec(params["w"].shape, const(3)),        # lstm W(resident)
            pl.BlockSpec(params["b"].shape, const(3)),        # lstm b(resident)
            pl.BlockSpec(params["fc_w"].shape, const(2)),     # fc_w  (resident)
            pl.BlockSpec(params["fc_b"].shape, const(2)),     # fc_b  (resident)
        ],
        out_specs=(
            pl.BlockSpec((1, Bp, Vp), lambda t, tok_ref: (t, 0, 0)),  # preds
            pl.BlockSpec((L, Bp, Dp), const(3)),              # final hidden
            pl.BlockSpec((L, Bp, Dp), const(3)),              # final cell
        ),
    )

    itemsize = lambda a: a.size * a.dtype.itemsize
    flops = T * (L * 2 * Bp * (2 * Dp) * Gp + 2 * Bp * Dp * Vp)
    transcendentals = T * L * Bp * (2 * Gp + Dp)
    bytes_accessed = (itemsize(params["emb"]) + itemsize(params["w"])
                      + itemsize(params["b"]) + itemsize(params["fc_w"])
                      + itemsize(params["fc_b"])
                      + 4 * L * Bp * Dp * 4            # h/c in + out
                      + T * Bp * Vp * 4 + T * B * 4)   # preds + tokens

    preds_p, h_out_p, c_out_p = pl.pallas_call(
        kernel,
        grid_spec=grid_spec,
        out_shape=(
            jax.ShapeDtypeStruct((T, Bp, Vp), jnp.float32),
            jax.ShapeDtypeStruct((L, Bp, Dp), jnp.float32),
            jax.ShapeDtypeStruct((L, Bp, Dp), jnp.float32),
        ),
        compiler_params=pltpu.CompilerParams(
            dimension_semantics=("arbitrary",)),
        cost_estimate=pl.CostEstimate(
            flops=flops, transcendentals=transcendentals,
            bytes_accessed=bytes_accessed),
    )(tok, params["emb"], h_p, c_p, params["w"], params["b"],
      params["fc_w"], params["fc_b"])

    return (preds_p[:, :B, :output_dim],
            h_out_p[:, :B, :H],
            c_out_p[:, :B, :H])


decoder_decode = jax.jit(_decode_impl, static_argnames=("output_dim",))


@functools.partial(jax.jit, static_argnames=("output_dim",))
def decoder_forward(params, tokens, hidden, cell, *, output_dim):
    """Single decoder step (module forward): tokens (B,), hidden/cell (L,B,H)."""
    preds, h, c = _decode_impl(params, tokens[None, :], hidden, cell,
                               output_dim=output_dim)
    return preds[0], h, c


# ------------------------------ pure-JAX reference --------------------------

def decoder_reference(raw, tokens, hidden, cell, *, mm_dtype=jnp.float32):
    """One decoder step. mm_dtype=bf16 mirrors the kernel's quantized matmuls."""
    cast = lambda a: a.astype(mm_dtype)
    x = raw["emb"][tokens]                                   # (B, E) f32
    H = hidden.shape[-1]
    new_h, new_c = [], []
    for l, (w_ih, w_hh, b) in enumerate(raw["lstm"]):
        gates = (jnp.dot(cast(x), cast(w_ih), preferred_element_type=jnp.float32)
                 + jnp.dot(cast(hidden[l]), cast(w_hh),
                           preferred_element_type=jnp.float32) + b)
        i = jax.nn.sigmoid(gates[:, 0 * H:1 * H])
        f = jax.nn.sigmoid(gates[:, 1 * H:2 * H])
        g = jnp.tanh(gates[:, 2 * H:3 * H])
        o = jax.nn.sigmoid(gates[:, 3 * H:4 * H])
        c = f * cell[l] + i * g
        h = o * jnp.tanh(c)
        new_h.append(h)
        new_c.append(c)
        x = h
    pred = (jnp.dot(cast(x), cast(raw["fc_w"]),
                    preferred_element_type=jnp.float32) + raw["fc_b"])
    return pred, jnp.stack(new_h), jnp.stack(new_c)


def decode_reference(raw, tokens_ts, hidden, cell, *, mm_dtype=jnp.float32):
    preds = []
    for t in range(tokens_ts.shape[0]):
        p, hidden, cell = decoder_reference(raw, tokens_ts[t], hidden, cell,
                                            mm_dtype=mm_dtype)
        preds.append(p)
    return jnp.stack(preds), hidden, cell


# --------------------------------- main --------------------------------------

if __name__ == "__main__":
    OUTPUT_DIM = 40   # target vocab
    EMB_DIM = 32
    HID_DIM = 32
    N_LAYERS = 2
    # dropout = 0.0 -> nn.Dropout / LSTM inter-layer dropout are identity
    BATCH = 2
    T_STEPS = 8       # fused teacher-forced decode length

    key = jax.random.PRNGKey(0)
    kp, kt, kh, kc = jax.random.split(key, 4)

    params, raw = init_decoder_params(kp, OUTPUT_DIM, EMB_DIM, HID_DIM, N_LAYERS)
    tokens_ts = jax.random.randint(kt, (T_STEPS, BATCH), 0, OUTPUT_DIM,
                                   dtype=jnp.int32)
    hidden = jax.random.normal(kh, (N_LAYERS, BATCH, HID_DIM), jnp.float32)
    cell = jax.random.normal(kc, (N_LAYERS, BATCH, HID_DIM), jnp.float32)

    # ---- single step (module forward semantics) ----
    pred, h1, c1 = decoder_forward(params, tokens_ts[0], hidden, cell,
                                   output_dim=OUTPUT_DIM)
    pred, h1, c1 = jax.block_until_ready((pred, h1, c1))
    assert pred.shape == (BATCH, OUTPUT_DIM)
    assert h1.shape == (N_LAYERS, BATCH, HID_DIM)
    assert c1.shape == (N_LAYERS, BATCH, HID_DIM)

    # ---- fused multi-step decode (weights stay VMEM-resident for T steps) ----
    preds, hT, cT = decoder_decode(params, tokens_ts, hidden, cell,
                                   output_dim=OUTPUT_DIM)
    preds, hT, cT = jax.block_until_ready((preds, hT, cT))
    assert preds.shape == (T_STEPS, BATCH, OUTPUT_DIM)
    assert bool(jnp.all(jnp.isfinite(preds)))

    # Tight check vs a reference that quantizes matmul operands to bf16 exactly
    # like the kernel does.
    ref_p1, ref_h1, ref_c1 = decoder_reference(raw, tokens_ts[0], hidden, cell,
                                               mm_dtype=jnp.bfloat16)
    assert jnp.allclose(pred, ref_p1, atol=2e-3, rtol=2e-3)
    assert jnp.allclose(h1, ref_h1, atol=2e-3, rtol=2e-3)
    assert jnp.allclose(c1, ref_c1, atol=2e-3, rtol=2e-3)

    ref_pq, ref_hq, ref_cq = decode_reference(raw, tokens_ts, hidden, cell,
                                              mm_dtype=jnp.bfloat16)
    assert jnp.allclose(preds, ref_pq, atol=5e-3, rtol=5e-3)
    assert jnp.allclose(hT, ref_hq, atol=5e-3, rtol=5e-3)
    assert jnp.allclose(cT, ref_cq, atol=5e-3, rtol=5e-3)

    # Loose check vs the full-precision reference (difference = bf16 weights).
    ref_pf, ref_hf, ref_cf = decode_reference(raw, tokens_ts, hidden, cell)
    assert jnp.allclose(preds, ref_pf, atol=1e-1, rtol=1e-1)
    assert jnp.allclose(hT, ref_hf, atol=1e-1, rtol=1e-1)
    assert jnp.allclose(cT, ref_cf, atol=1e-1, rtol=1e-1)

    print("KERNEL_OK")
</pallas_src>

<mosaic_0001>
module attributes {stable_mosaic.version = 11 : i64} {
  func.func @kernel(%arg0: i32, %arg1: memref<1x2xi32, #tpu.memory_space<smem>>, %arg2: memref<128x128xf32, #tpu.memory_space<vmem>>, %arg3: memref<2x8x128xf32, #tpu.memory_space<vmem>>, %arg4: memref<2x8x128xf32, #tpu.memory_space<vmem>>, %arg5: memref<2x256x128xbf16, #tpu.memory_space<vmem>>, %arg6: memref<2x1x128xf32, #tpu.memory_space<vmem>>, %arg7: memref<128x128xbf16, #tpu.memory_space<vmem>>, %arg8: memref<1x128xf32, #tpu.memory_space<vmem>>, %arg9: memref<1x8x128xf32, #tpu.memory_space<vmem>>, %arg10: memref<2x8x128xf32, #tpu.memory_space<vmem>>, %arg11: memref<2x8x128xf32, #tpu.memory_space<vmem>>) attributes {dimension_semantics = [#tpu.dimension_semantics<arbitrary>], iteration_bounds = array<i64: 1>, scalar_prefetch = 1 : i64, scratch_operands = 0 : i64, tpu.core_type = #tpu.core_type<tc>, window_params = [{pipeline_mode = #tpu.pipeline_mode<synchronous>, transform_indices = @transform_0, window_bounds = array<i64: 128, 128>}, {pipeline_mode = #tpu.pipeline_mode<synchronous>, transform_indices = @transform_1, window_bounds = array<i64: 2, 8, 128>}, {pipeline_mode = #tpu.pipeline_mode<synchronous>, transform_indices = @transform_2, window_bounds = array<i64: 2, 8, 128>}, {pipeline_mode = #tpu.pipeline_mode<synchronous>, transform_indices = @transform_3, window_bounds = array<i64: 2, 256, 128>}, {pipeline_mode = #tpu.pipeline_mode<synchronous>, transform_indices = @transform_4, window_bounds = array<i64: 2, 1, 128>}, {pipeline_mode = #tpu.pipeline_mode<synchronous>, transform_indices = @transform_5, window_bounds = array<i64: 128, 128>}, {pipeline_mode = #tpu.pipeline_mode<synchronous>, transform_indices = @transform_6, window_bounds = array<i64: 1, 128>}, {transform_indices = @transform_7, window_bounds = array<i64: 1, 8, 128>}, {pipeline_mode = #tpu.pipeline_mode<synchronous>, transform_indices = @transform_8, window_bounds = array<i64: 2, 8, 128>}, {pipeline_mode = #tpu.pipeline_mode<synchronous>, transform_indices = @transform_9, window_bounds = array<i64: 2, 8, 128>}]} {
    %c0_i32 = arith.constant 0 : i32
    %0 = arith.cmpi eq, %arg0, %c0_i32 : i32
    %1 = arith.extui %0 : i1 to i32
    %c0_i32_0 = arith.constant 0 : i32
    %2 = arith.cmpi ne, %1, %c0_i32_0 : i32
    scf.if %2 {
      %c0_61 = arith.constant 0 : index
      %c0_62 = arith.constant 0 : index
      %c0_63 = arith.constant 0 : index
      %107 = vector.load %arg3[%c0_61, %c0_62, %c0_63] : memref<2x8x128xf32, #tpu.memory_space<vmem>>, vector<2x8x128xf32>
      %c0_64 = arith.constant 0 : index
      %c0_65 = arith.constant 0 : index
      %c0_66 = arith.constant 0 : index
      %108 = vector.load %arg10[%c0_64, %c0_65, %c0_66] : memref<2x8x128xf32, #tpu.memory_space<vmem>>, vector<2x8x128xf32>
      tpu.vector_store %arg10[%c0_64, %c0_65, %c0_66], %107 {strides = array<i32>} : memref<2x8x128xf32, #tpu.memory_space<vmem>>, vector<2x8x128xf32>,
      %c0_67 = arith.constant 0 : index
      %c0_68 = arith.constant 0 : index
      %c0_69 = arith.constant 0 : index
      %109 = vector.load %arg4[%c0_67, %c0_68, %c0_69] : memref<2x8x128xf32, #tpu.memory_space<vmem>>, vector<2x8x128xf32>
      %c0_70 = arith.constant 0 : index
      %c0_71 = arith.constant 0 : index
      %c0_72 = arith.constant 0 : index
      %110 = vector.load %arg11[%c0_70, %c0_71, %c0_72] : memref<2x8x128xf32, #tpu.memory_space<vmem>>, vector<2x8x128xf32>
      tpu.vector_store %arg11[%c0_70, %c0_71, %c0_72], %109 {strides = array<i32>} : memref<2x8x128xf32, #tpu.memory_space<vmem>>, vector<2x8x128xf32>,
    } else {
    }
    %3 = arith.index_cast %arg0 : i32 to index
    %c0 = arith.constant 0 : index
    %4 = memref.load %arg1[%3, %c0] : memref<1x2xi32, #tpu.memory_space<smem>>
    %5 = arith.index_cast %4 : i32 to index
    %c0_1 = arith.constant 0 : index
    %6 = vector.load %arg2[%5, %c0_1] : memref<128x128xf32, #tpu.memory_space<vmem>>, vector<1x128xf32>
    %7 = arith.index_cast %arg0 : i32 to index
    %c1 = arith.constant 1 : index
    %8 = memref.load %arg1[%7, %c1] : memref<1x2xi32, #tpu.memory_space<smem>>
    %9 = arith.index_cast %8 : i32 to index
    %c0_2 = arith.constant 0 : index
    %10 = vector.load %arg2[%9, %c0_2] : memref<128x128xf32, #tpu.memory_space<vmem>>, vector<1x128xf32>
    %cst = arith.constant 0.000000e+00 : f32
    %11 = vector.broadcast %cst : f32 to vector<6x128xf32>
    %12 = tpu.concatenate %6, %10, %11 in 0 : vector<1x128xf32>, vector<1x128xf32>, vector<6x128xf32> -> vector<8x128xf32>
    %13 = tpu.iota {dimensions = array<i32: 1>} : vector<8x128xi32>
    %c64_i32 = arith.constant 64 : i32
    %14 = vector.broadcast %c64_i32 : i32 to vector<8x128xi32>
    %15 = arith.cmpi sge, %13, %14 : vector<8x128xi32>
    %c96_i32 = arith.constant 96 : i32
    %16 = vector.broadcast %c96_i32 : i32 to vector<8x128xi32>
    %17 = arith.cmpi slt, %13, %16 : vector<8x128xi32>
    %18 = arith.andi %15, %17 : vector<8x128xi1>
    %19 = tpu.iota {dimensions = array<i32: 1>} : vector<8x128xi32>
    %c32_i32 = arith.constant 32 : i32
    %20 = vector.broadcast %c32_i32 : i32 to vector<8x128xi32>
    %21 = arith.cmpi slt, %19, %20 : vector<8x128xi32>
    %c0_3 = arith.constant 0 : index
    %c0_4 = arith.constant 0 : index
    %c0_5 = arith.constant 0 : index
    %22 = vector.load %arg10[%c0_3, %c0_4, %c0_5] : memref<2x8x128xf32, #tpu.memory_space<vmem>>, vector<1x8x128xf32>
    %23 = vector.shape_cast %22 : vector<1x8x128xf32> to vector<8x128xf32>
    %c0_6 = arith.constant 0 : index
    %c0_7 = arith.constant 0 : index
    %c0_8 = arith.constant 0 : index
    %24 = vector.load %arg11[%c0_6, %c0_7, %c0_8] : memref<2x8x128xf32, #tpu.memory_space<vmem>>, vector<1x8x128xf32>
    %25 = vector.shape_cast %24 : vector<1x8x128xf32> to vector<8x128xf32>
    %26 = tpu.concatenate %12, %23 in 1 : vector<8x128xf32>, vector<8x128xf32> -> vector<8x256xf32>
    %27 = arith.truncf %26 : vector<8x256xf32> to vector<8x256xbf16>
    %c0_9 = arith.constant 0 : index
    %c0_10 = arith.constant 0 : index
    %c0_11 = arith.constant 0 : index
    %28 = vector.load %arg5[%c0_9, %c0_10, %c0_11] : memref<2x256x128xbf16, #tpu.memory_space<vmem>>, vector<1x256x128xbf16>
    %29 = vector.shape_cast %28 : vector<1x256x128xbf16> to vector<256x128xbf16>
    %cst_12 = arith.constant dense<0.000000e+00> : vector<8x128xf32>
    %30 = tpu.matmul %27, %29, %cst_12 {dimension_numbers = #tpu.dot_dimension_numbers<[1], [0], [0], [1], [0, 0, 1, 1], [], []>} : vector<8x256xbf16>, vector<256x128xbf16>, vector<8x128xf32> -> vector<8x128xf32>
    %c0_13 = arith.constant 0 : index
    %c0_14 = arith.constant 0 : index
    %c0_15 = arith.constant 0 : index
    %31 = vector.load %arg6[%c0_13, %c0_14, %c0_15] : memref<2x1x128xf32, #tpu.memory_space<vmem>>, vector<1x1x128xf32>
    %32 = vector.shape_cast %31 : vector<1x1x128xf32> to vector<1x128xf32>
    %33 = vector.broadcast %32 : vector<1x128xf32> to vector<8x128xf32>
    %34 = arith.addf %30, %33 : vector<8x128xf32>
    %35 = math.tanh %34 : vector<8x128xf32>
    %36 = arith.negf %34 : vector<8x128xf32>
    %37 = math.exp %36 : vector<8x128xf32>
    %cst_16 = arith.constant 1.000000e+00 : f32
    %38 = vector.broadcast %cst_16 : f32 to vector<8x128xf32>
    %39 = arith.addf %38, %37 : vector<8x128xf32>
    %40 = arith.divf %38, %39 : vector<8x128xf32>
    %41 = arith.select %18, %35, %40 : vector<8x128xi1>, vector<8x128xf32>
    %c96_i32_17 = arith.constant 96 : i32
    %42 = tpu.dynamic_rotate %41 by %c96_i32_17 dim 1 : vector<8x128xf32>, i32 -> vector<8x128xf32>
    %c64_i32_18 = arith.constant 64 : i32
    %43 = tpu.dynamic_rotate %41 by %c64_i32_18 dim 1 : vector<8x128xf32>, i32 -> vector<8x128xf32>
    %c32_i32_19 = arith.constant 32 : i32
    %44 = tpu.dynamic_rotate %41 by %c32_i32_19 dim 1 : vector<8x128xf32>, i32 -> vector<8x128xf32>
    %45 = arith.mulf %42, %25 : vector<8x128xf32>
    %46 = arith.mulf %41, %43 : vector<8x128xf32>
    %47 = arith.addf %45, %46 : vector<8x128xf32>
    %cst_20 = arith.constant 0.000000e+00 : f32
    %48 = vector.broadcast %cst_20 : f32 to vector<8x128xf32>
    %49 = arith.select %21, %47, %48 : vector<8x128xi1>, vector<8x128xf32>
    %50 = math.tanh %49 : vector<8x128xf32>
    %51 = arith.mulf %44, %50 : vector<8x128xf32>
    %cst_21 = arith.constant 0.000000e+00 : f32
    %52 = vector.broadcast %cst_21 : f32 to vector<8x128xf32>
    %53 = arith.select %21, %51, %52 : vector<8x128xi1>, vector<8x128xf32>
    %c0_22 = arith.constant 0 : index
    %c0_23 = arith.constant 0 : index
    %c0_24 = arith.constant 0 : index
    %54 = vector.load %arg10[%c0_22, %c0_23, %c0_24] : memref<2x8x128xf32, #tpu.memory_space<vmem>>, vector<1x8x128xf32>
    %55 = vector.shape_cast %54 : vector<1x8x128xf32> to vector<8x128xf32>
    %56 = vector.shape_cast %53 : vector<8x128xf32> to vector<1x8x128xf32>
    tpu.vector_store %arg10[%c0_22, %c0_23, %c0_24], %56 {strides = array<i32>} : memref<2x8x128xf32, #tpu.memory_space<vmem>>, vector<1x8x128xf32>,
    %c0_25 = arith.constant 0 : index
    %c0_26 = arith.constant 0 : index
    %c0_27 = arith.constant 0 : index
    %57 = vector.load %arg11[%c0_25, %c0_26, %c0_27] : memref<2x8x128xf32, #tpu.memory_space<vmem>>, vector<1x8x128xf32>
    %58 = vector.shape_cast %57 : vector<1x8x128xf32> to vector<8x128xf32>
    %59 = vector.shape_cast %49 : vector<8x128xf32> to vector<1x8x128xf32>
    tpu.vector_store %arg11[%c0_25, %c0_26, %c0_27], %59 {strides = array<i32>} : memref<2x8x128xf32, #tpu.memory_space<vmem>>, vector<1x8x128xf32>,
    %c1_28 = arith.constant 1 : index
    %c0_29 = arith.constant 0 : index
    %c0_30 = arith.constant 0 : index
    %60 = vector.load %arg10[%c1_28, %c0_29, %c0_30] : memref<2x8x128xf32, #tpu.memory_space<vmem>>, vector<1x8x128xf32>
    %61 = vector.shape_cast %60 : vector<1x8x128xf32> to vector<8x128xf32>
    %c1_31 = arith.constant 1 : index
    %c0_32 = arith.constant 0 : index
    %c0_33 = arith.constant 0 : index
    %62 = vector.load %arg11[%c1_31, %c0_32, %c0_33] : memref<2x8x128xf32, #tpu.memory_space<vmem>>, vector<1x8x128xf32>
    %63 = vector.shape_cast %62 : vector<1x8x128xf32> to vector<8x128xf32>
    %64 = tpu.concatenate %53, %61 in 1 : vector<8x128xf32>, vector<8x128xf32> -> vector<8x256xf32>
    %65 = arith.truncf %64 : vector<8x256xf32> to vector<8x256xbf16>
    %c1_34 = arith.constant 1 : index
    %c0_35 = arith.constant 0 : index
    %c0_36 = arith.constant 0 : index
    %66 = vector.load %arg5[%c1_34, %c0_35, %c0_36] : memref<2x256x128xbf16, #tpu.memory_space<vmem>>, vector<1x256x128xbf16>
    %67 = vector.shape_cast %66 : vector<1x256x128xbf16> to vector<256x128xbf16>
    %cst_37 = arith.constant dense<0.000000e+00> : vector<8x128xf32>
    %68 = tpu.matmul %65, %67, %cst_37 {dimension_numbers = #tpu.dot_dimension_numbers<[1], [0], [0], [1], [0, 0, 1, 1], [], []>} : vector<8x256xbf16>, vector<256x128xbf16>, vector<8x128xf32> -> vector<8x128xf32>
    %c1_38 = arith.constant 1 : index
    %c0_39 = arith.constant 0 : index
    %c0_40 = arith.constant 0 : index
    %69 = vector.load %arg6[%c1_38, %c0_39, %c0_40] : memref<2x1x128xf32, #tpu.memory_space<vmem>>, vector<1x1x128xf32>
    %70 = vector.shape_cast %69 : vector<1x1x128xf32> to vector<1x128xf32>
    %71 = vector.broadcast %70 : vector<1x128xf32> to vector<8x128xf32>
    %72 = arith.addf %68, %71 : vector<8x128xf32>
    %73 = math.tanh %72 : vector<8x128xf32>
    %74 = arith.negf %72 : vector<8x128xf32>
    %75 = math.exp %74 : vector<8x128xf32>
    %cst_41 = arith.constant 1.000000e+00 : f32
    %76 = vector.broadcast %cst_41 : f32 to vector<8x128xf32>
    %77 = arith.addf %76, %75 : vector<8x128xf32>
    %78 = arith.divf %76, %77 : vector<8x128xf32>
    %79 = arith.select %18, %73, %78 : vector<8x128xi1>, vector<8x128xf32>
    %c96_i32_42 = arith.constant 96 : i32
    %80 = tpu.dynamic_rotate %79 by %c96_i32_42 dim 1 : vector<8x128xf32>, i32 -> vector<8x128xf32>
    %c64_i32_43 = arith.constant 64 : i32
    %81 = tpu.dynamic_rotate %79 by %c64_i32_43 dim 1 : vector<8x128xf32>, i32 -> vector<8x128xf32>
    %c32_i32_44 = arith.constant 32 : i32
    %82 = tpu.dynamic_rotate %79 by %c32_i32_44 dim 1 : vector<8x128xf32>, i32 -> vector<8x128xf32>
    %83 = arith.mulf %80, %63 : vector<8x128xf32>
    %84 = arith.mulf %79, %81 : vector<8x128xf32>
    %85 = arith.addf %83, %84 : vector<8x128xf32>
    %cst_45 = arith.constant 0.000000e+00 : f32
    %86 = vector.broadcast %cst_45 : f32 to vector<8x128xf32>
    %87 = arith.select %21, %85, %86 : vector<8x128xi1>, vector<8x128xf32>
    %88 = math.tanh %87 : vector<8x128xf32>
    %89 = arith.mulf %82, %88 : vector<8x128xf32>
    %cst_46 = arith.constant 0.000000e+00 : f32
    %90 = vector.broadcast %cst_46 : f32 to vector<8x128xf32>
    %91 = arith.select %21, %89, %90 : vector<8x128xi1>, vector<8x128xf32>
    %c1_47 = arith.constant 1 : index
    %c0_48 = arith.constant 0 : index
    %c0_49 = arith.constant 0 : index
    %92 = vector.load %arg10[%c1_47, %c0_48, %c0_49] : memref<2x8x128xf32, #tpu.memory_space<vmem>>, vector<1x8x128xf32>
    %93 = vector.shape_cast %92 : vector<1x8x128xf32> to vector<8x128xf32>
    %94 = vector.shape_cast %91 : vector<8x128xf32> to vector<1x8x128xf32>
    tpu.vector_store %arg10[%c1_47, %c0_48, %c0_49], %94 {strides = array<i32>} : memref<2x8x128xf32, #tpu.memory_space<vmem>>, vector<1x8x128xf32>,
    %c1_50 = arith.constant 1 : index
    %c0_51 = arith.constant 0 : index
    %c0_52 = arith.constant 0 : index
    %95 = vector.load %arg11[%c1_50, %c0_51, %c0_52] : memref<2x8x128xf32, #tpu.memory_space<vmem>>, vector<1x8x128xf32>
    %96 = vector.shape_cast %95 : vector<1x8x128xf32> to vector<8x128xf32>
    %97 = vector.shape_cast %87 : vector<8x128xf32> to vector<1x8x128xf32>
    tpu.vector_store %arg11[%c1_50, %c0_51, %c0_52], %97 {strides = array<i32>} : memref<2x8x128xf32, #tpu.memory_space<vmem>>, vector<1x8x128xf32>,
    %98 = arith.truncf %91 : vector<8x128xf32> to vector<8x128xbf16>
    %c0_53 = arith.constant 0 : index
    %c0_54 = arith.constant 0 : index
    %99 = vector.load %arg7[%c0_53, %c0_54] : memref<128x128xbf16, #tpu.memory_space<vmem>>, vector<128x128xbf16>
    %cst_55 = arith.constant dense<0.000000e+00> : vector<8x128xf32>
    %100 = tpu.matmul %98, %99, %cst_55 {dimension_numbers = #tpu.dot_dimension_numbers<[1], [0], [0], [1], [0, 0, 1, 1], [], []>} : vector<8x128xbf16>, vector<128x128xbf16>, vector<8x128xf32> -> vector<8x128xf32>
    %c0_56 = arith.constant 0 : index
    %c0_57 = arith.constant 0 : index
    %101 = vector.load %arg8[%c0_56, %c0_57] : memref<1x128xf32, #tpu.memory_space<vmem>>, vector<1x128xf32>
    %102 = vector.broadcast %101 : vector<1x128xf32> to vector<8x128xf32>
    %103 = arith.addf %100, %102 : vector<8x128xf32>
    %c0_58 = arith.constant 0 : index
    %c0_59 = arith.constant 0 : index
    %c0_60 = arith.constant 0 : index
    %104 = vector.load %arg9[%c0_58, %c0_59, %c0_60] : memref<1x8x128xf32, #tpu.memory_space<vmem>>, vector<1x8x128xf32>
    %105 = vector.shape_cast %104 : vector<1x8x128xf32> to vector<8x128xf32>
    %106 = vector.shape_cast %103 : vector<8x128xf32> to vector<1x8x128xf32>
    tpu.vector_store %arg9[%c0_58, %c0_59, %c0_60], %106 {strides = array<i32>} : memref<1x8x128xf32, #tpu.memory_space<vmem>>, vector<1x8x128xf32>,
    return
  }
  func.func @transform_0(%arg0: i32, %arg1: memref<1x2xi32, #tpu.memory_space<smem>>) -> (i32, i32) {
    %c0_i32 = arith.constant 0 : i32
    %c0_i32_0 = arith.constant 0 : i32
    %c0_i32_1 = arith.constant 0 : i32
    return %c0_i32, %c0_i32_0 : i32, i32
  }
  func.func @transform_1(%arg0: i32, %arg1: memref<1x2xi32, #tpu.memory_space<smem>>) -> (i32, i32, i32) {
    %c0_i32 = arith.constant 0 : i32
    %c0_i32_0 = arith.constant 0 : i32
    %c0_i32_1 = arith.constant 0 : i32
    %c0_i32_2 = arith.constant 0 : i32
    return %c0_i32, %c0_i32_0, %c0_i32_1 : i32, i32, i32
  }
  func.func @transform_2(%arg0: i32, %arg1: memref<1x2xi32, #tpu.memory_space<smem>>) -> (i32, i32, i32) {
    %c0_i32 = arith.constant 0 : i32
    %c0_i32_0 = arith.constant 0 : i32
    %c0_i32_1 = arith.constant 0 : i32
    %c0_i32_2 = arith.constant 0 : i32
    return %c0_i32, %c0_i32_0, %c0_i32_1 : i32, i32, i32
  }
  func.func @transform_3(%arg0: i32, %arg1: memref<1x2xi32, #tpu.memory_space<smem>>) -> (i32, i32, i32) {
    %c0_i32 = arith.constant 0 : i32
    %c0_i32_0 = arith.constant 0 : i32
    %c0_i32_1 = arith.constant 0 : i32
    %c0_i32_2 = arith.constant 0 : i32
    return %c0_i32, %c0_i32_0, %c0_i32_1 : i32, i32, i32
  }
  func.func @transform_4(%arg0: i32, %arg1: memref<1x2xi32, #tpu.memory_space<smem>>) -> (i32, i32, i32) {
    %c0_i32 = arith.constant 0 : i32
    %c0_i32_0 = arith.constant 0 : i32
    %c0_i32_1 = arith.constant 0 : i32
    %c0_i32_2 = arith.constant 0 : i32
    return %c0_i32, %c0_i32_0, %c0_i32_1 : i32, i32, i32
  }
  func.func @transform_5(%arg0: i32, %arg1: memref<1x2xi32, #tpu.memory_space<smem>>) -> (i32, i32) {
    %c0_i32 = arith.constant 0 : i32
    %c0_i32_0 = arith.constant 0 : i32
    %c0_i32_1 = arith.constant 0 : i32
    return %c0_i32, %c0_i32_0 : i32, i32
  }
  func.func @transform_6(%arg0: i32, %arg1: memref<1x2xi32, #tpu.memory_space<smem>>) -> (i32, i32) {
    %c0_i32 = arith.constant 0 : i32
    %c0_i32_0 = arith.constant 0 : i32
    %c0_i32_1 = arith.constant 0 : i32
    return %c0_i32, %c0_i32_0 : i32, i32
  }
  func.func @transform_7(%arg0: i32, %arg1: memref<1x2xi32, #tpu.memory_space<smem>>) -> (i32, i32, i32) {
    %c0_i32 = arith.constant 0 : i32
    %c0_i32_0 = arith.constant 0 : i32
    %c0_i32_1 = arith.constant 0 : i32
    return %arg0, %c0_i32, %c0_i32_0 : i32, i32, i32
  }
  func.func @transform_8(%arg0: i32, %arg1: memref<1x2xi32, #tpu.memory_space<smem>>) -> (i32, i32, i32) {
    %c0_i32 = arith.constant 0 : i32
    %c0_i32_0 = arith.constant 0 : i32
    %c0_i32_1 = arith.constant 0 : i32
    %c0_i32_2 = arith.constant 0 : i32
    return %c0_i32, %c0_i32_0, %c0_i32_1 : i32, i32, i32
  }
  func.func @transform_9(%arg0: i32, %arg1: memref<1x2xi32, #tpu.memory_space<smem>>) -> (i32, i32, i32) {
    %c0_i32 = arith.constant 0 : i32
    %c0_i32_0 = arith.constant 0 : i32
    %c0_i32_1 = arith.constant 0 : i32
    %c0_i32_2 = arith.constant 0 : i32
    return %c0_i32, %c0_i32_0, %c0_i32_1 : i32, i32, i32
  }
}

</mosaic_0001>

<llo_original>
// kernel: decoder_forward.1
$region0: #{decoder_forward.1}
  #allocation0 [shape = 'u32[]', space=smem, size = 0x4, offset = 0x4, fixed_abs, tag = 'smem constant byte address 0x4 - core index']
  #allocation1 [shape = 'u32[144,128]{1,0:T(1,128)}', space=vmem, size = 0x12000, scoped, tag = 'internal scratch']
  #allocation2 [shape = 's32[1]{0}', space=sflag, size = 0x4, scoped, tag = 'scoped memory for decoder_forward.1']
  #allocation3 [shape = 'u8[512]{0}', space=smem, size = 0x200, scoped, tag = 'prefetched SMEM operand 0']
  %s0 = inlined_call_operand.vmem [shape: s32[1,2], index: 0, kind: input, shape index: {}]
  %s1 = inlined_call_operand.hbm [shape: f32[128,128], index: 1, kind: input, shape index: {}]
  %s2 = inlined_call_operand.vmem [shape: f32[2,8,128], index: 2, kind: input, shape index: {}]
  %s3 = inlined_call_operand.vmem [shape: f32[2,8,128], index: 3, kind: input, shape index: {}]
  %s4 = inlined_call_operand.hbm [shape: bf16[2,256,128], index: 4, kind: input, shape index: {}]
  %s5 = inlined_call_operand.vmem [shape: f32[2,1,128], index: 5, kind: input, shape index: {}]
  %s6 = inlined_call_operand.hbm [shape: bf16[128,128], index: 6, kind: input, shape index: {}]
  %s7 = inlined_call_operand.vmem [shape: f32[1,128], index: 7, kind: input, shape index: {}]
  %s8 = inlined_call_operand.vmem [shape: f32[1,8,128], index: 8, kind: output, shape index: {0}]
  %s9 = inlined_call_operand.vmem [shape: f32[2,8,128], index: 9, kind: output, shape index: {1}]
  %s10 = inlined_call_operand.vmem [shape: f32[2,8,128], index: 10, kind: output, shape index: {2}]
  %11 = xla_tuple %s8, %s9, %s10
  %s12 = sld [smem:[#allocation0]]
  $region70: #{decoder_forward.1} parent=0
    _
  %s14 = ssub.s32 1, %s12
  %s15 = scalar_select 0, %s14, %s12
  %s16 = sshll.u32 %s0, 4
  %s17 = int_to_ptr.vmem [resolvable:$true] %s16
  %19 = dma.vmem_to_smem %s17, 16, [#allocation3], [#allocation2]
  %20 = dma.done [#allocation2], 16
  %21 = sfence
  $region1: #{decoder_forward.1} parent=0
    #allocation4 [shape = 'u8[65536]{0}', space=vmem, size = 0x10000, scoped, tag = 'input window, operand 1, single buffered']
    #allocation5 [shape = 's32[1]{0}', space=sflag, size = 0x4, scoped, tag = 'scoped memory for decoder_forward.1']
    #allocation6 [shape = 'u8[131072]{0}', space=vmem, size = 0x20000, scoped, tag = 'input window, operand 4, single buffered']
    #allocation7 [shape = 's32[1]{0}', space=sflag, size = 0x4, scoped, tag = 'scoped memory for decoder_forward.1']
    #allocation8 [shape = 'u8[32768]{0}', space=vmem, size = 0x8000, scoped, tag = 'input window, operand 6, single buffered']
    %22 = vsyncpa [#allocation5], 0
    %23 = vsyncpa [#allocation7], 0
    // Predicated region
    $region2: #{decoder_forward.1} parent=1 // pred_check
      _
    $region3: #{decoder_forward.1} parent=1 // pred_check_branch
      %25 = sbr.rel (0) target = $region5
    $region4: #{decoder_forward.1} parent=1 // pred_region
      %s27 = ssub.s32 2048, 2048
      %28 = vsyncadd [#allocation5], %s27
      %s29 = sshll.u32 [#allocation4], 4
      %s30 = int_to_ptr.vmem [resolvable:$true] %s29
      %35 = dma.hbm_to_vmem [thread:$0]  %s1, 2048, %s30, [#allocation5], 128, 128, 8
    $region5: #{decoder_forward.1} parent=1 // pred_fallthru
      _
    // Predicated region
    $region6: #{decoder_forward.1} parent=1 // pred_check
      _
    $region7: #{decoder_forward.1} parent=1 // pred_check_branch
      %37 = sbr.rel (0) target = $region9
    $region8: #{decoder_forward.1} parent=1 // pred_region
      _
    $region9: #{decoder_forward.1} parent=1 // pred_fallthru
      _
    // Predicated region
    $region10: #{decoder_forward.1} parent=1 // pred_check
      _
    $region11: #{decoder_forward.1} parent=1 // pred_check_branch
      %39 = sbr.rel (0) target = $region13
    $region12: #{decoder_forward.1} parent=1 // pred_region
      _
    $region13: #{decoder_forward.1} parent=1 // pred_fallthru
      _
    // Predicated region
    $region14: #{decoder_forward.1} parent=1 // pred_check
      _
    $region15: #{decoder_forward.1} parent=1 // pred_check_branch
      %41 = sbr.rel (0) target = $region17
    $region16: #{decoder_forward.1} parent=1 // pred_region
      %s43 = ssub.s32 4096, 4096
      %44 = vsyncadd [#allocation7], %s43
      %s45 = sshll.u32 [#allocation6], 4
      %s46 = int_to_ptr.vmem [resolvable:$true] %s45
      %51 = dma.hbm_to_vmem [thread:$0]  %s4, 4096, %s46, [#allocation7], 64, 64, 4
    $region17: #{decoder_forward.1} parent=1 // pred_fallthru
      _
    // Predicated region
    $region18: #{decoder_forward.1} parent=1 // pred_check
      _
    $region19: #{decoder_forward.1} parent=1 // pred_check_branch
      %53 = sbr.rel (0) target = $region21
    $region20: #{decoder_forward.1} parent=1 // pred_region
      _
    $region21: #{decoder_forward.1} parent=1 // pred_fallthru
      _
    // Predicated region
    $region22: #{decoder_forward.1} parent=1 // pred_check
      _
    $region23: #{decoder_forward.1} parent=1 // pred_check_branch
      %55 = sbr.rel (0) target = $region25
    $region24: #{decoder_forward.1} parent=1 // pred_region
      %s57 = ssub.s32 1024, 1024
      %58 = vsyncadd [#allocation7], %s57
      %s59 = sshll.u32 [#allocation8], 4
      %s60 = int_to_ptr.vmem [resolvable:$true] %s59
      %65 = dma.hbm_to_vmem [thread:$0]  %s6, 1024, %s60, [#allocation7], 64, 64, 4
    $region25: #{decoder_forward.1} parent=1 // pred_fallthru
      _
    // Predicated region
    $region26: #{decoder_forward.1} parent=1 // pred_check
      _
    $region27: #{decoder_forward.1} parent=1 // pred_check_branch
      %67 = sbr.rel (0) target = $region29
    $region28: #{decoder_forward.1} parent=1 // pred_region
      _
    $region29: #{decoder_forward.1} parent=1 // pred_fallthru
      _
    // Predicated region
    $region30: #{decoder_forward.1} parent=1 // pred_check
      _
    $region31: #{decoder_forward.1} parent=1 // pred_check_branch
      %69 = sbr.rel (0) target = $region33
    $region32: #{decoder_forward.1} parent=1 // pred_region
      %70 = dma.done [#allocation5], 2048
    $region33: #{decoder_forward.1} parent=1 // pred_fallthru
      _
    // Predicated region
    $region34: #{decoder_forward.1} parent=1 // pred_check
      _
    $region35: #{decoder_forward.1} parent=1 // pred_check_branch
      %72 = sbr.rel (0) target = $region37
    $region36: #{decoder_forward.1} parent=1 // pred_region
      %73 = dma.done [#allocation7], 4096
    $region37: #{decoder_forward.1} parent=1 // pred_fallthru
      _
    // Predicated region
    $region38: #{decoder_forward.1} parent=1 // pred_check
      _
    $region39: #{decoder_forward.1} parent=1 // pred_check_branch
      %75 = sbr.rel (0) target = $region41
    $region40: #{decoder_forward.1} parent=1 // pred_region
      %76 = dma.done [#allocation7], 1024
    $region41: #{decoder_forward.1} parent=1 // pred_fallthru
      _
    %p78 = scmp.eq.s32.totalorder 0, 0
    // Predicated region
    $region42: #{decoder_forward.1} parent=1 // pred_check
      %p79 = pneg %p78
    $region43: #{decoder_forward.1} parent=1 // pred_check_branch
      %81 = sbr.rel (%p79) target = $region45
    $region44: #{decoder_forward.1} parent=1 // pred_region
      %v82 = vld [vmem:[%s2] sm:$0xff]
      %v83 = vld [vmem:[%s2 + $0x8] sm:$0xff]
      %84 = vst [vmem:[%s9] sm:$0xff] %v82
      %85 = vst [vmem:[%s9 + $0x8] sm:$0xff] %v83
      %v86 = vld [vmem:[%s3] sm:$0xff]
      %v87 = vld [vmem:[%s3 + $0x8] sm:$0xff]
      %88 = vst [vmem:[%s10] sm:$0xff] %v86
      %89 = vst [vmem:[%s10 + $0x8] sm:$0xff] %v87
    $region45: #{decoder_forward.1} parent=1 // pred_fallthru
      _
    %s90 = smul.u32 0, 128
    %s91 = sld [smem:[#allocation3 + %s90]]
    %s92 = scalar_lea.vmem [#allocation4], %s91
    %v93 = vld [vmem:[%s92] sm:$0x1]
    %s94 = sadd.s32 %s90, 1
    %s95 = sld [smem:[#allocation3 + %s94]]
    %s96 = scalar_lea.vmem [#allocation4], %s95
    %v97 = vld [vmem:[%s96] sm:$0x1]
    %v99 = vrot.slane %v97, 7
    %vm101 = vcmask 1040384
    %v102 = vsel %vm101, %v93, %v99
    %vm103 = vcmask 1041408
    %v104 = vsel %vm103, %v102, 0.0
    %v105 = vlaneseq
    %v106 = vand.u32 %v105, 127
    %vm107 = vcmp.ge.s32.totalorder %v106, 64
    %vm108 = vcmp.lt.s32.totalorder %v106, 96
    %vm109 = vmand %vm107, %vm108
    %vm110 = vcmp.lt.s32.totalorder %v106, 32
    %v111 = vld [vmem:[%s9] sm:$0xff]
    %v112 = vld [vmem:[%s10] sm:$0xff]
    %v113 = vpack.c.bf16 %v104, %v104
    %v114 = vpack.c.bf16 %v111, %v111
    %v115 = vld [vmem:[#allocation6] sm:$0xf]
    %v116 = vld [vmem:[#allocation6 + $0x4] sm:$0xf]
    %v117 = vld [vmem:[#allocation6 + $0x8] sm:$0xf]
    %v118 = vld [vmem:[#allocation6 + $0xc] sm:$0xf]
    %v119 = vld [vmem:[#allocation6 + $0x10] sm:$0xf]
    %v120 = vld [vmem:[#allocation6 + $0x14] sm:$0xf]
    %v121 = vld [vmem:[#allocation6 + $0x18] sm:$0xf]
    %v122 = vld [vmem:[#allocation6 + $0x1c] sm:$0xf]
    %v123 = vld [vmem:[#allocation6 + $0x20] sm:$0xf]
    %v124 = vld [vmem:[#allocation6 + $0x24] sm:$0xf]
    %v125 = vld [vmem:[#allocation6 + $0x28] sm:$0xf]
    %v126 = vld [vmem:[#allocation6 + $0x2c] sm:$0xf]
    %v127 = vld [vmem:[#allocation6 + $0x30] sm:$0xf]
    %v128 = vld [vmem:[#allocation6 + $0x34] sm:$0xf]
    %v129 = vld [vmem:[#allocation6 + $0x38] sm:$0xf]
    %v130 = vld [vmem:[#allocation6 + $0x3c] sm:$0xf]
    %v131 = vld [vmem:[#allocation6 + $0x40] sm:$0xf]
    %v132 = vld [vmem:[#allocation6 + $0x44] sm:$0xf]
    %v133 = vld [vmem:[#allocation6 + $0x48] sm:$0xf]
    %v134 = vld [vmem:[#allocation6 + $0x4c] sm:$0xf]
    %v135 = vld [vmem:[#allocation6 + $0x50] sm:$0xf]
    %v136 = vld [vmem:[#allocation6 + $0x54] sm:$0xf]
    %v137 = vld [vmem:[#allocation6 + $0x58] sm:$0xf]
    %v138 = vld [vmem:[#allocation6 + $0x5c] sm:$0xf]
    %v139 = vld [vmem:[#allocation6 + $0x60] sm:$0xf]
    %v140 = vld [vmem:[#allocation6 + $0x64] sm:$0xf]
    %v141 = vld [vmem:[#allocation6 + $0x68] sm:$0xf]
    %v142 = vld [vmem:[#allocation6 + $0x6c] sm:$0xf]
    %v143 = vld [vmem:[#allocation6 + $0x70] sm:$0xf]
    %v144 = vld [vmem:[#allocation6 + $0x74] sm:$0xf]
    %v145 = vld [vmem:[#allocation6 + $0x78] sm:$0xf]
    %v146 = vld [vmem:[#allocation6 + $0x7c] sm:$0xf]
    %v147 = vld [vmem:[%s5] sm:$0x1]
    %v149 = vlaneseq
    %v150 = vshrl.u32 %v149, 7
    %v151 = vsub.s32 0, %v150
    %v152 = vrot.slane %v147, %v151
    %v186 = vunpack.c.l.b16 %v115
    %v187 = vunpack.c.l.b16 %v116
    %v188 = vunpack.c.l.b16 %v117
    %v189 = vunpack.c.l.b16 %v118
    %v190 = vunpack.c.l.b16 %v119
    %v191 = vunpack.c.l.b16 %v120
    %v192 = vunpack.c.l.b16 %v121
    %v193 = vunpack.c.l.b16 %v122
    %v194 = vunpack.c.l.b16 %v123
    %v195 = vunpack.c.l.b16 %v124
    %v196 = vunpack.c.l.b16 %v125
    %v197 = vunpack.c.l.b16 %v126
    %v198 = vunpack.c.l.b16 %v127
    %v199 = vunpack.c.l.b16 %v128
    %v200 = vunpack.c.l.b16 %v129
    %v201 = vunpack.c.l.b16 %v130
    %v202 = vunpack.c.l.b16 %v131
    %v203 = vunpack.c.l.b16 %v132
    %v204 = vunpack.c.l.b16 %v133
    %v205 = vunpack.c.l.b16 %v134
    %v206 = vunpack.c.l.b16 %v135
    %v207 = vunpack.c.l.b16 %v136
    %v208 = vunpack.c.l.b16 %v137
    %v209 = vunpack.c.l.b16 %v138
    %v210 = vunpack.c.l.b16 %v139
    %v211 = vunpack.c.l.b16 %v140
    %v212 = vunpack.c.l.b16 %v141
    %v213 = vunpack.c.l.b16 %v142
    %v214 = vunpack.c.l.b16 %v143
    %v215 = vunpack.c.l.b16 %v144
    %v216 = vunpack.c.l.b16 %v145
    %v217 = vunpack.c.l.b16 %v146
    %v218 = vpack.c.b16 %v187, %v186
    %v219 = vpack.c.b16 %v189, %v188
    %v220 = vpack.c.b16 %v191, %v190
    %v221 = vpack.c.b16 %v193, %v192
    %v222 = vpack.c.b16 %v195, %v194
    %v223 = vpack.c.b16 %v197, %v196
    %v224 = vpack.c.b16 %v199, %v198
    %v225 = vpack.c.b16 %v201, %v200
    %v226 = vpack.c.b16 %v203, %v202
    %v227 = vpack.c.b16 %v205, %v204
    %v228 = vpack.c.b16 %v207, %v206
    %v229 = vpack.c.b16 %v209, %v208
    %v230 = vpack.c.b16 %v211, %v210
    %v231 = vpack.c.b16 %v213, %v212
    %v232 = vpack.c.b16 %v215, %v214
    %v233 = vpack.c.b16 %v217, %v216
    %250 = vmatprep.subr.bf16.mxu0 0
    %251 = vmatpush1.bf16.msra.mxu0 %v218
    %252 = vmatprep.subr.bf16.mxu0 0
    %253 = vmatpush1.bf16.msra.mxu0 %v219
    %254 = vmatprep.subr.bf16.mxu0 0
    %255 = vmatpush1.bf16.msra.mxu0 %v220
    %256 = vmatprep.subr.bf16.mxu0 0
    %257 = vmatpush1.bf16.msra.mxu0 %v221
    %258 = vmatprep.subr.bf16.mxu0 0
    %259 = vmatpush1.bf16.msra.mxu0 %v222
    %260 = vmatprep.subr.bf16.mxu0 0
    %261 = vmatpush1.bf16.msra.mxu0 %v223
    %262 = vmatprep.subr.bf16.mxu0 0
    %263 = vmatpush1.bf16.msra.mxu0 %v224
    %264 = vmatprep.subr.bf16.mxu0 0
    %265 = vmatpush1.bf16.msra.mxu0 %v225
    %266 = vmatprep.subr.bf16.mxu0 0
    %267 = vmatpush1.bf16.msra.mxu0 %v226
    %268 = vmatprep.subr.bf16.mxu0 0
    %269 = vmatpush1.bf16.msra.mxu0 %v227
    %270 = vmatprep.subr.bf16.mxu0 0
    %271 = vmatpush1.bf16.msra.mxu0 %v228
    %272 = vmatprep.subr.bf16.mxu0 0
    %273 = vmatpush1.bf16.msra.mxu0 %v229
    %274 = vmatprep.subr.bf16.mxu0 0
    %275 = vmatpush1.bf16.msra.mxu0 %v230
    %276 = vmatprep.subr.bf16.mxu0 0
    %277 = vmatpush1.bf16.msra.mxu0 %v231
    %278 = vmatprep.subr.bf16.mxu0 0
    %279 = vmatpush1.bf16.msra.mxu0 %v232
    %280 = vmatprep.subr.bf16.mxu0 0
    %281 = vmatpush1.bf16.msra.mxu0 %v233
    %282 = vmatprep.mubr.bf16.mxu0 %v114
    %283 = vmatmul.mubr.bf16.gmra.mrb[0].mxu0 %v113
    %v284 = vpop.f32.mrb[0].mxu0
    %v285 = vadd.f32 %v152, %v284
    %v286 = vpop.f32.mrb[0].mxu0
    %v287 = vpop.f32.mrb[0].mxu0
    %v288 = vpop.f32.mrb[0].mxu0
    %289 = vdwg.mxu0
    %v290 = vtanh.pop %v285
    %v291 = vxor.u32 %v285, 2147483648
    %v292 = vmul.f32 %v291, 1.442695
    %v293 = vpow.pop %v292
    %v294 = vadd.f32 %v293, 1.0
    %v295 = vrcp.pop %v294
    %v296 = vmul.f32 1.0, %v295
    %v297 = vsel %vm109, %v290, %v296
    %298 = vrot.lane.b32.xlu0 %v297, 96
    %v299 = vpop.permute.xlu0 %298
    %300 = vrot.lane.b32.xlu0 %v297, 64
    %v301 = vpop.permute.xlu0 %300
    %302 = vrot.lane.b32.xlu0 %v297, 32
    %v303 = vpop.permute.xlu0 %302
    %v304 = vmul.f32 %v299, %v112
    %v305 = vmul.f32 %v297, %v301
    %v306 = vadd.f32 %v304, %v305
    %v307 = vsel %vm110, %v306, 0.0
    %v308 = vtanh.pop %v307
    %v309 = vmul.f32 %v303, %v308
    %v310 = vsel %vm110, %v309, 0.0
    %311 = vst [vmem:[%s9] sm:$0xff] %v310
    %312 = vst [vmem:[%s10] sm:$0xff] %v307
    %s313 = scalar_lea.vmem %s9, 8
    %v314 = vld [vmem:[%s313] sm:$0xff]
    %s315 = scalar_lea.vmem %s10, 8
    %v316 = vld [vmem:[%s315] sm:$0xff]
    %v317 = vpack.c.bf16 %v310, %v310
    %v318 = vpack.c.bf16 %v314, %v314
    %s319 = scalar_lea.vmem [#allocation6], 128
    %v320 = vld [vmem:[%s319] sm:$0xf]
    %v321 = vld [vmem:[%s319 + $0x4] sm:$0xf]
    %v322 = vld [vmem:[%s319 + $0x8] sm:$0xf]
    %v323 = vld [vmem:[%s319 + $0xc] sm:$0xf]
    %v324 = vld [vmem:[%s319 + $0x10] sm:$0xf]
    %v325 = vld [vmem:[%s319 + $0x14] sm:$0xf]
    %v326 = vld [vmem:[%s319 + $0x18] sm:$0xf]
    %v327 = vld [vmem:[%s319 + $0x1c] sm:$0xf]
    %v328 = vld [vmem:[%s319 + $0x20] sm:$0xf]
    %v329 = vld [vmem:[%s319 + $0x24] sm:$0xf]
    %v330 = vld [vmem:[%s319 + $0x28] sm:$0xf]
    %v331 = vld [vmem:[%s319 + $0x2c] sm:$0xf]
    %v332 = vld [vmem:[%s319 + $0x30] sm:$0xf]
    %v333 = vld [vmem:[%s319 + $0x34] sm:$0xf]
    %v334 = vld [vmem:[%s319 + $0x38] sm:$0xf]
    %v335 = vld [vmem:[%s319 + $0x3c] sm:$0xf]
    %v336 = vld [vmem:[%s319 + $0x40] sm:$0xf]
    %v337 = vld [vmem:[%s319 + $0x44] sm:$0xf]
    %v338 = vld [vmem:[%s319 + $0x48] sm:$0xf]
    %v339 = vld [vmem:[%s319 + $0x4c] sm:$0xf]
    %v340 = vld [vmem:[%s319 + $0x50] sm:$0xf]
    %v341 = vld [vmem:[%s319 + $0x54] sm:$0xf]
    %v342 = vld [vmem:[%s319 + $0x58] sm:$0xf]
    %v343 = vld [vmem:[%s319 + $0x5c] sm:$0xf]
    %v344 = vld [vmem:[%s319 + $0x60] sm:$0xf]
    %v345 = vld [vmem:[%s319 + $0x64] sm:$0xf]
    %v346 = vld [vmem:[%s319 + $0x68] sm:$0xf]
    %v347 = vld [vmem:[%s319 + $0x6c] sm:$0xf]
    %v348 = vld [vmem:[%s319 + $0x70] sm:$0xf]
    %v349 = vld [vmem:[%s319 + $0x74] sm:$0xf]
    %v350 = vld [vmem:[%s319 + $0x78] sm:$0xf]
    %v351 = vld [vmem:[%s319 + $0x7c] sm:$0xf]
    %s352 = scalar_lea.vmem %s5, 1
    %v353 = vld [vmem:[%s352] sm:$0x1]
    %v355 = vlaneseq
    %v356 = vshrl.u32 %v355, 7
    %v357 = vsub.s32 0, %v356
    %v358 = vrot.slane %v353, %v357
    %v392 = vunpack.c.l.b16 %v320
    %v393 = vunpack.c.l.b16 %v321
    %v394 = vunpack.c.l.b16 %v322
    %v395 = vunpack.c.l.b16 %v323
    %v396 = vunpack.c.l.b16 %v324
    %v397 = vunpack.c.l.b16 %v325
    %v398 = vunpack.c.l.b16 %v326
    %v399 = vunpack.c.l.b16 %v327
    %v400 = vunpack.c.l.b16 %v328
    %v401 = vunpack.c.l.b16 %v329
    %v402 = vunpack.c.l.b16 %v330
    %v403 = vunpack.c.l.b16 %v331
    %v404 = vunpack.c.l.b16 %v332
    %v405 = vunpack.c.l.b16 %v333
    %v406 = vunpack.c.l.b16 %v334
    %v407 = vunpack.c.l.b16 %v335
    %v408 = vunpack.c.l.b16 %v336
    %v409 = vunpack.c.l.b16 %v337
    %v410 = vunpack.c.l.b16 %v338
    %v411 = vunpack.c.l.b16 %v339
    %v412 = vunpack.c.l.b16 %v340
    %v413 = vunpack.c.l.b16 %v341
    %v414 = vunpack.c.l.b16 %v342
    %v415 = vunpack.c.l.b16 %v343
    %v416 = vunpack.c.l.b16 %v344
    %v417 = vunpack.c.l.b16 %v345
    %v418 = vunpack.c.l.b16 %v346
    %v419 = vunpack.c.l.b16 %v347
    %v420 = vunpack.c.l.b16 %v348
    %v421 = vunpack.c.l.b16 %v349
    %v422 = vunpack.c.l.b16 %v350
    %v423 = vunpack.c.l.b16 %v351
    %v424 = vpack.c.b16 %v393, %v392
    %v425 = vpack.c.b16 %v395, %v394
    %v426 = vpack.c.b16 %v397, %v396
    %v427 = vpack.c.b16 %v399, %v398
    %v428 = vpack.c.b16 %v401, %v400
    %v429 = vpack.c.b16 %v403, %v402
    %v430 = vpack.c.b16 %v405, %v404
    %v431 = vpack.c.b16 %v407, %v406
    %v432 = vpack.c.b16 %v409, %v408
    %v433 = vpack.c.b16 %v411, %v410
    %v434 = vpack.c.b16 %v413, %v412
    %v435 = vpack.c.b16 %v415, %v414
    %v436 = vpack.c.b16 %v417, %v416
    %v437 = vpack.c.b16 %v419, %v418
    %v438 = vpack.c.b16 %v421, %v420
    %v439 = vpack.c.b16 %v423, %v422
    %456 = vmatprep.subr.bf16.mxu0 0
    %457 = vmatpush1.bf16.msra.mxu0 %v424
    %458 = vmatprep.subr.bf16.mxu0 0
    %459 = vmatpush1.bf16.msra.mxu0 %v425
    %460 = vmatprep.subr.bf16.mxu0 0
    %461 = vmatpush1.bf16.msra.mxu0 %v426
    %462 = vmatprep.subr.bf16.mxu0 0
    %463 = vmatpush1.bf16.msra.mxu0 %v427
    %464 = vmatprep.subr.bf16.mxu0 0
    %465 = vmatpush1.bf16.msra.mxu0 %v428
    %466 = vmatprep.subr.bf16.mxu0 0
    %467 = vmatpush1.bf16.msra.mxu0 %v429
    %468 = vmatprep.subr.bf16.mxu0 0
    %469 = vmatpush1.bf16.msra.mxu0 %v430
    %470 = vmatprep.subr.bf16.mxu0 0
    %471 = vmatpush1.bf16.msra.mxu0 %v431
    %472 = vmatprep.subr.bf16.mxu0 0
    %473 = vmatpush1.bf16.msra.mxu0 %v432
    %474 = vmatprep.subr.bf16.mxu0 0
    %475 = vmatpush1.bf16.msra.mxu0 %v433
    %476 = vmatprep.subr.bf16.mxu0 0
    %477 = vmatpush1.bf16.msra.mxu0 %v434
    %478 = vmatprep.subr.bf16.mxu0 0
    %479 = vmatpush1.bf16.msra.mxu0 %v435
    %480 = vmatprep.subr.bf16.mxu0 0
    %481 = vmatpush1.bf16.msra.mxu0 %v436
    %482 = vmatprep.subr.bf16.mxu0 0
    %483 = vmatpush1.bf16.msra.mxu0 %v437
    %484 = vmatprep.subr.bf16.mxu0 0
    %485 = vmatpush1.bf16.msra.mxu0 %v438
    %486 = vmatprep.subr.bf16.mxu0 0
    %487 = vmatpush1.bf16.msra.mxu0 %v439
    %488 = vmatprep.mubr.bf16.mxu0 %v318
    %489 = vmatmul.mubr.bf16.gmra.mrb[0].mxu0 %v317
    %v490 = vpop.f32.mrb[0].mxu0
    %v491 = vadd.f32 %v358, %v490
    %v492 = vpop.f32.mrb[0].mxu0
    %v493 = vpop.f32.mrb[0].mxu0
    %v494 = vpop.f32.mrb[0].mxu0
    %495 = vdwg.mxu0
    %v496 = vtanh.pop %v491
    %v497 = vxor.u32 %v491, 2147483648
    %v498 = vmul.f32 %v497, 1.442695
    %v499 = vpow.pop %v498
    %v500 = vadd.f32 %v499, 1.0
    %v501 = vrcp.pop %v500
    %v502 = vmul.f32 1.0, %v501
    %v503 = vsel %vm109, %v496, %v502
    %504 = vrot.lane.b32.xlu0 %v503, 96
    %v505 = vpop.permute.xlu0 %504
    %506 = vrot.lane.b32.xlu0 %v503, 64
    %v507 = vpop.permute.xlu0 %506
    %508 = vrot.lane.b32.xlu0 %v503, 32
    %v509 = vpop.permute.xlu0 %508
    %v510 = vmul.f32 %v505, %v316
    %v511 = vmul.f32 %v503, %v507
    %v512 = vadd.f32 %v510, %v511
    %v513 = vsel %vm110, %v512, 0.0
    %v514 = vtanh.pop %v513
    %v515 = vmul.f32 %v509, %v514
    %v516 = vsel %vm110, %v515, 0.0
    %517 = vst [vmem:[%s313] sm:$0xff] %v516
    %518 = vst [vmem:[%s315] sm:$0xff] %v513
    %v519 = vpack.c.bf16 %v516, %v516
    %v520 = vld [vmem:[#allocation8] sm:$0xf]
    %v521 = vld [vmem:[#allocation8 + $0x4] sm:$0xf]
    %v522 = vld [vmem:[#allocation8 + $0x8] sm:$0xf]
    %v523 = vld [vmem:[#allocation8 + $0xc] sm:$0xf]
    %v524 = vld [vmem:[#allocation8 + $0x10] sm:$0xf]
    %v525 = vld [vmem:[#allocation8 + $0x14] sm:$0xf]
    %v526 = vld [vmem:[#allocation8 + $0x18] sm:$0xf]
    %v527 = vld [vmem:[#allocation8 + $0x1c] sm:$0xf]
    %v528 = vld [vmem:[#allocation8 + $0x20] sm:$0xf]
    %v529 = vld [vmem:[#allocation8 + $0x24] sm:$0xf]
    %v530 = vld [vmem:[#allocation8 + $0x28] sm:$0xf]
    %v531 = vld [vmem:[#allocation8 + $0x2c] sm:$0xf]
    %v532 = vld [vmem:[#allocation8 + $0x30] sm:$0xf]
    %v533 = vld [vmem:[#allocation8 + $0x34] sm:$0xf]
    %v534 = vld [vmem:[#allocation8 + $0x38] sm:$0xf]
    %v535 = vld [vmem:[#allocation8 + $0x3c] sm:$0xf]
    %v536 = vld [vmem:[%s7] sm:$0x1]
    %v538 = vlaneseq
    %v539 = vshrl.u32 %v538, 7
    %v540 = vsub.s32 0, %v539
    %v541 = vrot.slane %v536, %v540
    %v559 = vunpack.c.l.b16 %v520
    %v560 = vunpack.c.l.b16 %v521
    %v561 = vunpack.c.l.b16 %v522
    %v562 = vunpack.c.l.b16 %v523
    %v563 = vunpack.c.l.b16 %v524
    %v564 = vunpack.c.l.b16 %v525
    %v565 = vunpack.c.l.b16 %v526
    %v566 = vunpack.c.l.b16 %v527
    %v567 = vunpack.c.l.b16 %v528
    %v568 = vunpack.c.l.b16 %v529
    %v569 = vunpack.c.l.b16 %v530
    %v570 = vunpack.c.l.b16 %v531
    %v571 = vunpack.c.l.b16 %v532
    %v572 = vunpack.c.l.b16 %v533
    %v573 = vunpack.c.l.b16 %v534
    %v574 = vunpack.c.l.b16 %v535
    %v575 = vpack.c.b16 %v560, %v559
    %v576 = vpack.c.b16 %v562, %v561
    %v577 = vpack.c.b16 %v564, %v563
    %v578 = vpack.c.b16 %v566, %v565
    %v579 = vpack.c.b16 %v568, %v567
    %v580 = vpack.c.b16 %v570, %v569
    %v581 = vpack.c.b16 %v572, %v571
    %v582 = vpack.c.b16 %v574, %v573
    %591 = vmatprep.subr.bf16.mxu0 0
    %592 = vmatpush1.bf16.msra.mxu0 %v575
    %593 = vmatprep.subr.bf16.mxu0 0
    %594 = vmatpush1.bf16.msra.mxu0 %v576
    %595 = vmatprep.subr.bf16.mxu0 0
    %596 = vmatpush1.bf16.msra.mxu0 %v577
    %597 = vmatprep.subr.bf16.mxu0 0
    %598 = vmatpush1.bf16.msra.mxu0 %v578
    %599 = vmatprep.subr.bf16.mxu0 0
    %600 = vmatpush1.bf16.msra.mxu0 %v579
    %601 = vmatprep.subr.bf16.mxu0 0
    %602 = vmatpush1.bf16.msra.mxu0 %v580
    %603 = vmatprep.subr.bf16.mxu0 0
    %604 = vmatpush1.bf16.msra.mxu0 %v581
    %605 = vmatprep.subr.bf16.mxu0 0
    %606 = vmatpush1.bf16.msra.mxu0 %v582
    %607 = vmatprep.subr.bf16.mxu0 0
    %608 = vmatpush1.bf16.msra.mxu0 0
    %609 = vmatprep.subr.bf16.mxu0 0
    %610 = vmatpush1.bf16.msra.mxu0 0
    %611 = vmatprep.subr.bf16.mxu0 0
    %612 = vmatpush1.bf16.msra.mxu0 0
    %613 = vmatprep.subr.bf16.mxu0 0
    %614 = vmatpush1.bf16.msra.mxu0 0
    %615 = vmatprep.subr.bf16.mxu0 0
    %616 = vmatpush1.bf16.msra.mxu0 0
    %617 = vmatprep.subr.bf16.mxu0 0
    %618 = vmatpush1.bf16.msra.mxu0 0
    %619 = vmatprep.subr.bf16.mxu0 0
    %620 = vmatpush1.bf16.msra.mxu0 0
    %621 = vmatprep.subr.bf16.mxu0 0
    %622 = vmatpush1.bf16.msra.mxu0 0
    %623 = vmatprep.mubr.bf16.mxu0 0
    %624 = vmatmul.mubr.bf16.gmra.mrb[0].mxu0 %v519
    %v625 = vpop.f32.mrb[0].mxu0
    %v626 = vadd.f32 %v541, %v625
    %v627 = vpop.f32.mrb[0].mxu0
    %v628 = vpop.f32.mrb[0].mxu0
    %v629 = vpop.f32.mrb[0].mxu0
    %630 = vdwg.mxu0
    %631 = vst [vmem:[%s8] sm:$0xff] %v626
    // Predicated region
    $region46: #{decoder_forward.1} parent=1 // pred_check
      _
    $region47: #{decoder_forward.1} parent=1 // pred_check_branch
      %633 = sbr.rel (0) target = $region49
    $region48: #{decoder_forward.1} parent=1 // pred_region
      _
    $region49: #{decoder_forward.1} parent=1 // pred_fallthru
      _
    // Predicated region
    $region50: #{decoder_forward.1} parent=1 // pred_check
      _
    $region51: #{decoder_forward.1} parent=1 // pred_check_branch
      %635 = sbr.rel (0) target = $region53
    $region52: #{decoder_forward.1} parent=1 // pred_region
      _
    $region53: #{decoder_forward.1} parent=1 // pred_fallthru
      _
    // Predicated region
    $region54: #{decoder_forward.1} parent=1 // pred_check
      _
    $region55: #{decoder_forward.1} parent=1 // pred_check_branch
      %637 = sbr.rel (0) target = $region57
    $region56: #{decoder_forward.1} parent=1 // pred_region
      _
    $region57: #{decoder_forward.1} parent=1 // pred_fallthru
      _
    // Predicated region
    $region58: #{decoder_forward.1} parent=1 // pred_check
      _
    $region59: #{decoder_forward.1} parent=1 // pred_check_branch
      %639 = sbr.rel (0) target = $region61
    $region60: #{decoder_forward.1} parent=1 // pred_region
      _
    $region61: #{decoder_forward.1} parent=1 // pred_fallthru
      _
    // Predicated region
    $region62: #{decoder_forward.1} parent=1 // pred_check
      _
    $region63: #{decoder_forward.1} parent=1 // pred_check_branch
      %641 = sbr.rel (0) target = $region65
    $region64: #{decoder_forward.1} parent=1 // pred_region
      _
    $region65: #{decoder_forward.1} parent=1 // pred_fallthru
      _
    // Predicated region
    $region66: #{decoder_forward.1} parent=1 // pred_check
      _
    $region67: #{decoder_forward.1} parent=1 // pred_check_branch
      %643 = sbr.rel (0) target = $region69
    $region68: #{decoder_forward.1} parent=1 // pred_region
      _
    $region69: #{decoder_forward.1} parent=1 // pred_fallthru
      _
    %644 = vsyncpa [#allocation5], 1
    %645 = vsyncpa [#allocation7], 1

</llo_original>
